<compile_context>
chip_gen: v5e
topology: v5e:2x2
jax: 0.10.0
libtpu: 0.0.40
codegen_flags: <defaults>
</compile_context>

<pallas_src>
import jax
import jax.numpy as jnp
from jax.experimental import pallas as pl
from jax.experimental.pallas import tpu as pltpu


def make_neumf_kernel(num_fc_layers):
    """Builds a kernel for a fixed (static) number of MLP layers.

    Kernel argument order:
      x_mlp_ref [2*Dmlp, TB], u_mf_ref [Dmf, TB], i_mf_ref [Dmf, TB],
      then per fc layer: W [out, in], b [out, 1],
      then w_logit_mlp [L_last, 1], w_logit_mf [Dmf, 1], b_logit [1, 1],
      then out_ref [1, TB].
    """

    def kernel(x_mlp_ref, u_mf_ref, i_mf_ref, *rest):
        out_ref = rest[-1]
        params = rest[:-1]

        # --- GMF branch: elementwise product of user/item MF embeddings -----
        mf = u_mf_ref[...] * i_mf_ref[...]                    # [Dmf, TB]
        # TODO(synk): torch.nn.Dropout(dropout_rate_mf) -> identity (eval).

        # --- MLP tower (transposed): h <- relu(W @ h + b) --------------------
        h = x_mlp_ref[...]                                    # [2*Dmlp, TB]
        for layer in range(num_fc_layers):
            w = params[2 * layer][...]                        # [out, in]
            b = params[2 * layer + 1][...]                    # [out, 1]
            h = jnp.dot(w, h, preferred_element_type=jnp.float32) + b
            h = jnp.maximum(h, 0.0)
        # TODO(synk): torch.nn.Dropout(dropout_rate_mlp) -> identity (eval).

        # --- Fusion: split-weight logits on the VPU (no N=1 MXU matmul) -----
        w_lm = params[2 * num_fc_layers][...]                 # [L_last, 1]
        w_lf = params[2 * num_fc_layers + 1][...]             # [Dmf, 1]
        b_l = params[2 * num_fc_layers + 2][...]              # [1, 1]
        logits = (jnp.sum(h * w_lm, axis=0, keepdims=True)
                  + jnp.sum(mf * w_lf, axis=0, keepdims=True)
                  + b_l)                                      # [1, TB] lane-dense
        out_ref[...] = jax.nn.sigmoid(logits)

    return kernel


def neumf_forward(user_indices, item_indices,
                  emb_user_mlp, emb_item_mlp, emb_user_mf, emb_item_mf,
                  fc_weights, fc_biases, w_logit, b_logit,
                  *, tile_b=1024):
    """Fused NeuMF hot path.

    fc_weights[l]: [in, out], fc_biases[l]: [1, out] (x @ W + b convention);
    w_logit: [layers[-1] + latent_dim_mf, 1]; b_logit: [1, 1].
    tile_b: batch tile, multiple of 256 (sweep 512-2048 for large batches).
    """
    assert tile_b % 256 == 0 and tile_b >= 256
    B = user_indices.shape[0]
    d_mlp2 = emb_user_mlp.shape[1] + emb_item_mlp.shape[1]
    d_mf = emb_user_mf.shape[1]
    num_fc = len(fc_weights)
    l_last = fc_weights[-1].shape[1]

    n_tiles = int(pl.cdiv(B, tile_b))
    b_pad = n_tiles * tile_b

    # Embedding gathers (plain-JAX glue), directly in feature-major layout so
    # the kernel's batch axis lands on lanes.  In a real deployment the
    # transposed tables would be stored parameters (the .T is trace-time).
    u_mlp_t = jnp.take(emb_user_mlp.T, user_indices, axis=1)   # [Dmlp, B]
    i_mlp_t = jnp.take(emb_item_mlp.T, item_indices, axis=1)   # [Dmlp, B]
    u_mf_t = jnp.take(emb_user_mf.T, user_indices, axis=1)     # [Dmf,  B]
    i_mf_t = jnp.take(emb_item_mf.T, item_indices, axis=1)     # [Dmf,  B]

    # Pre-concatenate the MLP inputs (removes an in-kernel concat).
    x_mlp_t = jnp.concatenate([u_mlp_t, i_mlp_t], axis=0)      # [2*Dmlp, B]

    pad = b_pad - B
    if pad:
        x_mlp_t = jnp.pad(x_mlp_t, ((0, 0), (0, pad)))
        u_mf_t = jnp.pad(u_mf_t, ((0, 0), (0, pad)))
        i_mf_t = jnp.pad(i_mf_t, ((0, 0), (0, pad)))

    # Parameters in kernel orientation: W [out, in], b [out, 1].
    ws = [w.T for w in fc_weights]
    bs = [b.reshape(-1, 1) for b in fc_biases]
    w_logit_mlp = w_logit[:l_last, :]                          # [L_last, 1]
    w_logit_mf = w_logit[l_last:, :]                           # [Dmf, 1]
    b_log = b_logit.reshape(1, 1)

    inputs = [x_mlp_t, u_mf_t, i_mf_t]
    in_specs = [
        pl.BlockSpec((d_mlp2, tile_b), lambda i: (0, i)),
        pl.BlockSpec((d_mf, tile_b), lambda i: (0, i)),
        pl.BlockSpec((d_mf, tile_b), lambda i: (0, i)),
    ]

    def resident(arr):
        # Constant block index -> fetched once, reused across all grid steps.
        return pl.BlockSpec(arr.shape, lambda i: (0, 0))

    for w, b in zip(ws, bs):
        inputs += [w, b]
        in_specs += [resident(w), resident(b)]
    for p in (w_logit_mlp, w_logit_mf, b_log):
        inputs.append(p)
        in_specs.append(resident(p))

    out_t = pl.pallas_call(
        make_neumf_kernel(num_fc),
        out_shape=jax.ShapeDtypeStruct((1, b_pad), jnp.float32),
        grid=(n_tiles,),
        in_specs=in_specs,
        out_specs=pl.BlockSpec((1, tile_b), lambda i: (0, i)),
        compiler_params=pltpu.CompilerParams(
            # "parallel" lets Mosaic shard the batch grid across the two
            # TensorCores on v7x; neutral on single-core v5e/v6e.
            dimension_semantics=("parallel",),
            # Per-tile VMEM footprint is tiny here; set vmem_limit_bytes
            # explicitly only when sweeping tile_b well above 2048 (v7x has a
            # 32 MiB scoped default against a 64 MiB physical ceiling).
        ),
    )(*inputs)

    return out_t[0, :B].reshape(B, 1)


def neumf_reference(user_indices, item_indices,
                    emb_user_mlp, emb_item_mlp, emb_user_mf, emb_item_mf,
                    fc_weights, fc_biases, w_logit, b_logit):
    """Pure-JAX reference (standard batch-major orientation)."""
    u_mlp = jnp.take(emb_user_mlp, user_indices, axis=0)
    i_mlp = jnp.take(emb_item_mlp, item_indices, axis=0)
    u_mf = jnp.take(emb_user_mf, user_indices, axis=0)
    i_mf = jnp.take(emb_item_mf, item_indices, axis=0)
    mf = u_mf * i_mf
    mlp = jnp.concatenate([u_mlp, i_mlp], axis=1)
    for w, b in zip(fc_weights, fc_biases):
        mlp = jnp.maximum(mlp @ w + b, 0.0)
    vec = jnp.concatenate([mlp, mf], axis=-1)
    return jax.nn.sigmoid(vec @ w_logit + b_logit)


if __name__ == "__main__":
    # --- synthetic config (mirrors the module's __init__ shapes) ------------
    num_users = 16
    num_items = 32
    latent_dim_mf = 8
    latent_dim_mlp = 8
    layers = [2 * latent_dim_mlp, 32, 16, 8]   # config['layers']

    key = jax.random.PRNGKey(0)
    keys = jax.random.split(key, 20)
    ki = iter(keys)

    # Embedding tables.
    emb_user_mf = jax.random.normal(next(ki), (num_users, latent_dim_mf), jnp.float32) * 0.1
    emb_item_mf = jax.random.normal(next(ki), (num_items, latent_dim_mf), jnp.float32) * 0.1
    emb_user_mlp = jax.random.normal(next(ki), (num_users, latent_dim_mlp), jnp.float32) * 0.1
    emb_item_mlp = jax.random.normal(next(ki), (num_items, latent_dim_mlp), jnp.float32) * 0.1

    # MLP tower weights (stored [in, out]) + biases ([1, out]).
    fc_weights, fc_biases = [], []
    for in_size, out_size in zip(layers[:-1], layers[1:]):
        fc_weights.append(
            jax.random.normal(next(ki), (in_size, out_size), jnp.float32)
            * (1.0 / jnp.sqrt(in_size)))
        fc_biases.append(
            jax.random.normal(next(ki), (1, out_size), jnp.float32) * 0.01)

    # Final logits layer: in = layers[-1] + latent_dim_mf, out = 1.
    logit_in = layers[-1] + latent_dim_mf
    w_logit = jax.random.normal(next(ki), (logit_in, 1), jnp.float32) * (
        1.0 / jnp.sqrt(logit_in))
    b_logit = jax.random.normal(next(ki), (1, 1), jnp.float32) * 0.01

    params = (emb_user_mlp, emb_item_mlp, emb_user_mf, emb_item_mf,
              fc_weights, fc_biases, w_logit, b_logit)

    ok = True
    # Check 1: small batch (single grid tile).  Check 2: multi-tile grid path.
    for batch, tile_b in ((8, 256), (600, 256)):
        u_idx = jax.random.randint(next(ki), (batch,), 0, num_users, jnp.int32)
        i_idx = jax.random.randint(next(ki), (batch,), 0, num_items, jnp.int32)
        titles = jnp.zeros((batch, 4), jnp.float32)  # unused by the forward pass

        out = neumf_forward(u_idx, i_idx, *params, tile_b=tile_b)
        out = jax.block_until_ready(out)
        ref = neumf_reference(u_idx, i_idx, *params)

        ok &= out.shape == (batch, 1)
        ok &= bool(jnp.allclose(out, ref, atol=1e-5, rtol=1e-5))

    assert ok
    print("KERNEL_OK")
</pallas_src>

<mosaic_0001>
module attributes {stable_mosaic.version = 11 : i64} {
  func.func @kernel(%arg0: i32, %arg1: memref<16x256xf32, #tpu.memory_space<vmem>>, %arg2: memref<8x256xf32, #tpu.memory_space<vmem>>, %arg3: memref<8x256xf32, #tpu.memory_space<vmem>>, %arg4: memref<32x16xf32, #tpu.memory_space<vmem>>, %arg5: memref<32x1xf32, #tpu.memory_space<vmem>>, %arg6: memref<16x32xf32, #tpu.memory_space<vmem>>, %arg7: memref<16x1xf32, #tpu.memory_space<vmem>>, %arg8: memref<8x16xf32, #tpu.memory_space<vmem>>, %arg9: memref<8x1xf32, #tpu.memory_space<vmem>>, %arg10: memref<8x1xf32, #tpu.memory_space<vmem>>, %arg11: memref<8x1xf32, #tpu.memory_space<vmem>>, %arg12: memref<1x1xf32, #tpu.memory_space<vmem>>, %arg13: memref<1x256xf32, #tpu.memory_space<vmem>>) attributes {dimension_semantics = [#tpu.dimension_semantics<parallel>], iteration_bounds = array<i64: 1>, scalar_prefetch = 0 : i64, scratch_operands = 0 : i64, tpu.core_type = #tpu.core_type<tc>, window_params = [{transform_indices = @transform_0, window_bounds = array<i64: 16, 256>}, {transform_indices = @transform_1, window_bounds = array<i64: 8, 256>}, {transform_indices = @transform_2, window_bounds = array<i64: 8, 256>}, {pipeline_mode = #tpu.pipeline_mode<synchronous>, transform_indices = @transform_3, window_bounds = array<i64: 32, 16>}, {pipeline_mode = #tpu.pipeline_mode<synchronous>, transform_indices = @transform_4, window_bounds = array<i64: 32, 1>}, {pipeline_mode = #tpu.pipeline_mode<synchronous>, transform_indices = @transform_5, window_bounds = array<i64: 16, 32>}, {pipeline_mode = #tpu.pipeline_mode<synchronous>, transform_indices = @transform_6, window_bounds = array<i64: 16, 1>}, {pipeline_mode = #tpu.pipeline_mode<synchronous>, transform_indices = @transform_7, window_bounds = array<i64: 8, 16>}, {pipeline_mode = #tpu.pipeline_mode<synchronous>, transform_indices = @transform_8, window_bounds = array<i64: 8, 1>}, {pipeline_mode = #tpu.pipeline_mode<synchronous>, transform_indices = @transform_9, window_bounds = array<i64: 8, 1>}, {pipeline_mode = #tpu.pipeline_mode<synchronous>, transform_indices = @transform_10, window_bounds = array<i64: 8, 1>}, {pipeline_mode = #tpu.pipeline_mode<synchronous>, transform_indices = @transform_11, window_bounds = array<i64: 1, 1>}, {transform_indices = @transform_12, window_bounds = array<i64: 1, 256>}]} {
    %c0 = arith.constant 0 : index
    %c0_0 = arith.constant 0 : index
    %0 = vector.load %arg2[%c0, %c0_0] : memref<8x256xf32, #tpu.memory_space<vmem>>, vector<8x256xf32>
    %c0_1 = arith.constant 0 : index
    %c0_2 = arith.constant 0 : index
    %1 = vector.load %arg3[%c0_1, %c0_2] : memref<8x256xf32, #tpu.memory_space<vmem>>, vector<8x256xf32>
    %2 = arith.mulf %0, %1 : vector<8x256xf32>
    %c0_3 = arith.constant 0 : index
    %c0_4 = arith.constant 0 : index
    %3 = vector.load %arg1[%c0_3, %c0_4] : memref<16x256xf32, #tpu.memory_space<vmem>>, vector<16x256xf32>
    %c0_5 = arith.constant 0 : index
    %c0_6 = arith.constant 0 : index
    %4 = vector.load %arg4[%c0_5, %c0_6] : memref<32x16xf32, #tpu.memory_space<vmem>>, vector<32x16xf32>
    %c0_7 = arith.constant 0 : index
    %c0_8 = arith.constant 0 : index
    %5 = vector.load %arg5[%c0_7, %c0_8] : memref<32x1xf32, #tpu.memory_space<vmem>>, vector<32x1xf32>
    %cst = arith.constant dense<0.000000e+00> : vector<32x256xf32>
    %6 = tpu.matmul %4, %3, %cst {dimension_numbers = #tpu.dot_dimension_numbers<[1], [0], [0], [1], [0, 0, 1, 1], [], []>} : vector<32x16xf32>, vector<16x256xf32>, vector<32x256xf32> -> vector<32x256xf32>
    %7 = vector.broadcast %5 : vector<32x1xf32> to vector<32x256xf32>
    %8 = arith.addf %6, %7 : vector<32x256xf32>
    %cst_9 = arith.constant 0.000000e+00 : f32
    %9 = vector.broadcast %cst_9 : f32 to vector<32x256xf32>
    %10 = arith.maximumf %8, %9 : vector<32x256xf32>
    %c0_10 = arith.constant 0 : index
    %c0_11 = arith.constant 0 : index
    %11 = vector.load %arg6[%c0_10, %c0_11] : memref<16x32xf32, #tpu.memory_space<vmem>>, vector<16x32xf32>
    %c0_12 = arith.constant 0 : index
    %c0_13 = arith.constant 0 : index
    %12 = vector.load %arg7[%c0_12, %c0_13] : memref<16x1xf32, #tpu.memory_space<vmem>>, vector<16x1xf32>
    %cst_14 = arith.constant dense<0.000000e+00> : vector<16x256xf32>
    %13 = tpu.matmul %11, %10, %cst_14 {dimension_numbers = #tpu.dot_dimension_numbers<[1], [0], [0], [1], [0, 0, 1, 1], [], []>} : vector<16x32xf32>, vector<32x256xf32>, vector<16x256xf32> -> vector<16x256xf32>
    %14 = vector.broadcast %12 : vector<16x1xf32> to vector<16x256xf32>
    %15 = arith.addf %13, %14 : vector<16x256xf32>
    %cst_15 = arith.constant 0.000000e+00 : f32
    %16 = vector.broadcast %cst_15 : f32 to vector<16x256xf32>
    %17 = arith.maximumf %15, %16 : vector<16x256xf32>
    %c0_16 = arith.constant 0 : index
    %c0_17 = arith.constant 0 : index
    %18 = vector.load %arg8[%c0_16, %c0_17] : memref<8x16xf32, #tpu.memory_space<vmem>>, vector<8x16xf32>
    %c0_18 = arith.constant 0 : index
    %c0_19 = arith.constant 0 : index
    %19 = vector.load %arg9[%c0_18, %c0_19] : memref<8x1xf32, #tpu.memory_space<vmem>>, vector<8x1xf32>
    %cst_20 = arith.constant dense<0.000000e+00> : vector<8x256xf32>
    %20 = tpu.matmul %18, %17, %cst_20 {dimension_numbers = #tpu.dot_dimension_numbers<[1], [0], [0], [1], [0, 0, 1, 1], [], []>} : vector<8x16xf32>, vector<16x256xf32>, vector<8x256xf32> -> vector<8x256xf32>
    %21 = vector.broadcast %19 : vector<8x1xf32> to vector<8x256xf32>
    %22 = arith.addf %20, %21 : vector<8x256xf32>
    %cst_21 = arith.constant 0.000000e+00 : f32
    %23 = vector.broadcast %cst_21 : f32 to vector<8x256xf32>
    %24 = arith.maximumf %22, %23 : vector<8x256xf32>
    %c0_22 = arith.constant 0 : index
    %c0_23 = arith.constant 0 : index
    %25 = vector.load %arg10[%c0_22, %c0_23] : memref<8x1xf32, #tpu.memory_space<vmem>>, vector<8x1xf32>
    %c0_24 = arith.constant 0 : index
    %c0_25 = arith.constant 0 : index
    %26 = vector.load %arg11[%c0_24, %c0_25] : memref<8x1xf32, #tpu.memory_space<vmem>>, vector<8x1xf32>
    %c0_26 = arith.constant 0 : index
    %c0_27 = arith.constant 0 : index
    %27 = vector.load %arg12[%c0_26, %c0_27] : memref<1x1xf32, #tpu.memory_space<vmem>>, vector<1x1xf32>
    %28 = vector.broadcast %25 : vector<8x1xf32> to vector<8x256xf32>
    %29 = arith.mulf %24, %28 : vector<8x256xf32>
    %cst_28 = arith.constant dense<0.000000e+00> : vector<256xf32>
    %30 = vector.multi_reduction <add>, %29, %cst_28 [0] : vector<8x256xf32> to vector<256xf32>
    %31 = vector.shape_cast %30 : vector<256xf32> to vector<1x256xf32>
    %32 = vector.broadcast %26 : vector<8x1xf32> to vector<8x256xf32>
    %33 = arith.mulf %2, %32 : vector<8x256xf32>
    %cst_29 = arith.constant dense<0.000000e+00> : vector<256xf32>
    %34 = vector.multi_reduction <add>, %33, %cst_29 [0] : vector<8x256xf32> to vector<256xf32>
    %35 = vector.shape_cast %34 : vector<256xf32> to vector<1x256xf32>
    %36 = arith.addf %31, %35 : vector<1x256xf32>
    %37 = vector.broadcast %27 : vector<1x1xf32> to vector<1x256xf32>
    %38 = arith.addf %36, %37 : vector<1x256xf32>
    %39 = arith.negf %38 : vector<1x256xf32>
    %40 = math.exp %39 : vector<1x256xf32>
    %cst_30 = arith.constant 1.000000e+00 : f32
    %41 = vector.broadcast %cst_30 : f32 to vector<1x256xf32>
    %42 = arith.addf %41, %40 : vector<1x256xf32>
    %43 = arith.divf %41, %42 : vector<1x256xf32>
    %c0_31 = arith.constant 0 : index
    %c0_32 = arith.constant 0 : index
    %44 = vector.load %arg13[%c0_31, %c0_32] : memref<1x256xf32, #tpu.memory_space<vmem>>, vector<1x256xf32>
    tpu.vector_store %arg13[%c0_31, %c0_32], %43 {strides = array<i32>} : memref<1x256xf32, #tpu.memory_space<vmem>>, vector<1x256xf32>,
    return
  }
  func.func @transform_0(%arg0: i32) -> (i32, i32) {
    %c0_i32 = arith.constant 0 : i32
    %c0_i32_0 = arith.constant 0 : i32
    return %c0_i32, %arg0 : i32, i32
  }
  func.func @transform_1(%arg0: i32) -> (i32, i32) {
    %c0_i32 = arith.constant 0 : i32
    %c0_i32_0 = arith.constant 0 : i32
    return %c0_i32, %arg0 : i32, i32
  }
  func.func @transform_2(%arg0: i32) -> (i32, i32) {
    %c0_i32 = arith.constant 0 : i32
    %c0_i32_0 = arith.constant 0 : i32
    return %c0_i32, %arg0 : i32, i32
  }
  func.func @transform_3(%arg0: i32) -> (i32, i32) {
    %c0_i32 = arith.constant 0 : i32
    %c0_i32_0 = arith.constant 0 : i32
    %c0_i32_1 = arith.constant 0 : i32
    return %c0_i32, %c0_i32_0 : i32, i32
  }
  func.func @transform_4(%arg0: i32) -> (i32, i32) {
    %c0_i32 = arith.constant 0 : i32
    %c0_i32_0 = arith.constant 0 : i32
    %c0_i32_1 = arith.constant 0 : i32
    return %c0_i32, %c0_i32_0 : i32, i32
  }
  func.func @transform_5(%arg0: i32) -> (i32, i32) {
    %c0_i32 = arith.constant 0 : i32
    %c0_i32_0 = arith.constant 0 : i32
    %c0_i32_1 = arith.constant 0 : i32
    return %c0_i32, %c0_i32_0 : i32, i32
  }
  func.func @transform_6(%arg0: i32) -> (i32, i32) {
    %c0_i32 = arith.constant 0 : i32
    %c0_i32_0 = arith.constant 0 : i32
    %c0_i32_1 = arith.constant 0 : i32
    return %c0_i32, %c0_i32_0 : i32, i32
  }
  func.func @transform_7(%arg0: i32) -> (i32, i32) {
    %c0_i32 = arith.constant 0 : i32
    %c0_i32_0 = arith.constant 0 : i32
    %c0_i32_1 = arith.constant 0 : i32
    return %c0_i32, %c0_i32_0 : i32, i32
  }
  func.func @transform_8(%arg0: i32) -> (i32, i32) {
    %c0_i32 = arith.constant 0 : i32
    %c0_i32_0 = arith.constant 0 : i32
    %c0_i32_1 = arith.constant 0 : i32
    return %c0_i32, %c0_i32_0 : i32, i32
  }
  func.func @transform_9(%arg0: i32) -> (i32, i32) {
    %c0_i32 = arith.constant 0 : i32
    %c0_i32_0 = arith.constant 0 : i32
    %c0_i32_1 = arith.constant 0 : i32
    return %c0_i32, %c0_i32_0 : i32, i32
  }
  func.func @transform_10(%arg0: i32) -> (i32, i32) {
    %c0_i32 = arith.constant 0 : i32
    %c0_i32_0 = arith.constant 0 : i32
    %c0_i32_1 = arith.constant 0 : i32
    return %c0_i32, %c0_i32_0 : i32, i32
  }
  func.func @transform_11(%arg0: i32) -> (i32, i32) {
    %c0_i32 = arith.constant 0 : i32
    %c0_i32_0 = arith.constant 0 : i32
    %c0_i32_1 = arith.constant 0 : i32
    return %c0_i32, %c0_i32_0 : i32, i32
  }
  func.func @transform_12(%arg0: i32) -> (i32, i32) {
    %c0_i32 = arith.constant 0 : i32
    %c0_i32_0 = arith.constant 0 : i32
    return %c0_i32, %arg0 : i32, i32
  }
}

</mosaic_0001>

<llo_original>
// kernel: tpu_custom_call.1
$region0: #{tpu_custom_call.1}
  #allocation0 [shape = 'u32[]', space=smem, size = 0x4, offset = 0x4, fixed_abs, tag = 'smem constant byte address 0x4 - core index']
  #allocation1 [shape = 'u32[72,128]{1,0:T(1,128)}', space=vmem, size = 0x9000, scoped, tag = 'internal scratch']
  #allocation2 [shape = 'f32[1,1]{1,0:T(1,128)S(1)}', space=vmem, size = 0x200, scoped, tag = 'scoped memory for tpu_custom_call.1']
  %s0 = inlined_call_operand.vmem [shape: f32[16,256], index: 0, kind: input, shape index: {}]
  %s1 = inlined_call_operand.vmem [shape: f32[8,256], index: 1, kind: input, shape index: {}]
  %s2 = inlined_call_operand.vmem [shape: f32[8,256], index: 2, kind: input, shape index: {}]
  %s3 = inlined_call_operand.vmem [shape: f32[32,16], index: 3, kind: input, shape index: {}]
  %s4 = inlined_call_operand.vmem [shape: f32[32,1], index: 4, kind: input, shape index: {}]
  %s5 = inlined_call_operand.vmem [shape: f32[16,32], index: 5, kind: input, shape index: {}]
  %s6 = inlined_call_operand.vmem [shape: f32[16,1], index: 6, kind: input, shape index: {}]
  %s7 = inlined_call_operand.vmem [shape: f32[8,16], index: 7, kind: input, shape index: {}]
  %s8 = inlined_call_operand.vmem [shape: f32[8,1], index: 8, kind: input, shape index: {}]
  %s9 = inlined_call_operand.vmem [shape: f32[8,1], index: 9, kind: input, shape index: {}]
  %s10 = inlined_call_operand.vmem [shape: f32[8,1], index: 10, kind: input, shape index: {}]
  %s11 = inlined_call_operand.<no memory space> [shape: f32[1,1], index: 11, kind: input, shape index: {}]
  %s12 = inlined_call_operand.hbm [shape: f32[1,256], index: 12, kind: output, shape index: {}]
  %s13 = sld [smem:[#allocation0]]
  $region58: #{tpu_custom_call.1} parent=0
    _
  %s15 = ssub.s32 1, %s13
  %s16 = scalar_select 0, %s15, %s13
  %v17 = vstv %s11
  %18 = vst [vmem:[#allocation2] sm:$0x1] %v17
  $region1: #{tpu_custom_call.1} parent=0
    #allocation3 [shape = 'u8[1024]{0}', space=vmem, size = 0x400, scoped, tag = 'output window, operand 0, single buffered']
    #allocation4 [shape = 's32[1]{0}', space=sflag, size = 0x4, scoped, tag = 'scoped memory for tpu_custom_call.1']
    %19 = vsyncpa [#allocation4], 0
    // Predicated region
    $region2: #{tpu_custom_call.1} parent=1 // pred_check
      _
    $region3: #{tpu_custom_call.1} parent=1 // pred_check_branch
      %21 = sbr.rel (0) target = $region5
    $region4: #{tpu_custom_call.1} parent=1 // pred_region
      _
    $region5: #{tpu_custom_call.1} parent=1 // pred_fallthru
      _
    // Predicated region
    $region6: #{tpu_custom_call.1} parent=1 // pred_check
      _
    $region7: #{tpu_custom_call.1} parent=1 // pred_check_branch
      %23 = sbr.rel (0) target = $region9
    $region8: #{tpu_custom_call.1} parent=1 // pred_region
      _
    $region9: #{tpu_custom_call.1} parent=1 // pred_fallthru
      _
    // Predicated region
    $region10: #{tpu_custom_call.1} parent=1 // pred_check
      _
    $region11: #{tpu_custom_call.1} parent=1 // pred_check_branch
      %25 = sbr.rel (0) target = $region13
    $region12: #{tpu_custom_call.1} parent=1 // pred_region
      _
    $region13: #{tpu_custom_call.1} parent=1 // pred_fallthru
      _
    // Predicated region
    $region14: #{tpu_custom_call.1} parent=1 // pred_check
      _
    $region15: #{tpu_custom_call.1} parent=1 // pred_check_branch
      %27 = sbr.rel (0) target = $region17
    $region16: #{tpu_custom_call.1} parent=1 // pred_region
      _
    $region17: #{tpu_custom_call.1} parent=1 // pred_fallthru
      _
    // Predicated region
    $region18: #{tpu_custom_call.1} parent=1 // pred_check
      _
    $region19: #{tpu_custom_call.1} parent=1 // pred_check_branch
      %29 = sbr.rel (0) target = $region21
    $region20: #{tpu_custom_call.1} parent=1 // pred_region
      _
    $region21: #{tpu_custom_call.1} parent=1 // pred_fallthru
      _
    // Predicated region
    $region22: #{tpu_custom_call.1} parent=1 // pred_check
      _
    $region23: #{tpu_custom_call.1} parent=1 // pred_check_branch
      %31 = sbr.rel (0) target = $region25
    $region24: #{tpu_custom_call.1} parent=1 // pred_region
      _
    $region25: #{tpu_custom_call.1} parent=1 // pred_fallthru
      _
    // Predicated region
    $region26: #{tpu_custom_call.1} parent=1 // pred_check
      _
    $region27: #{tpu_custom_call.1} parent=1 // pred_check_branch
      %33 = sbr.rel (0) target = $region29
    $region28: #{tpu_custom_call.1} parent=1 // pred_region
      _
    $region29: #{tpu_custom_call.1} parent=1 // pred_fallthru
      _
    // Predicated region
    $region30: #{tpu_custom_call.1} parent=1 // pred_check
      _
    $region31: #{tpu_custom_call.1} parent=1 // pred_check_branch
      %35 = sbr.rel (0) target = $region33
    $region32: #{tpu_custom_call.1} parent=1 // pred_region
      _
    $region33: #{tpu_custom_call.1} parent=1 // pred_fallthru
      _
    // Predicated region
    $region34: #{tpu_custom_call.1} parent=1 // pred_check
      _
    $region35: #{tpu_custom_call.1} parent=1 // pred_check_branch
      %37 = sbr.rel (0) target = $region37
    $region36: #{tpu_custom_call.1} parent=1 // pred_region
      _
    $region37: #{tpu_custom_call.1} parent=1 // pred_fallthru
      _
    // Predicated region
    $region38: #{tpu_custom_call.1} parent=1 // pred_check
      _
    $region39: #{tpu_custom_call.1} parent=1 // pred_check_branch
      %39 = sbr.rel (0) target = $region41
    $region40: #{tpu_custom_call.1} parent=1 // pred_region
      _
    $region41: #{tpu_custom_call.1} parent=1 // pred_fallthru
      _
    // Predicated region
    $region42: #{tpu_custom_call.1} parent=1 // pred_check
      _
    $region43: #{tpu_custom_call.1} parent=1 // pred_check_branch
      %41 = sbr.rel (0) target = $region45
    $region44: #{tpu_custom_call.1} parent=1 // pred_region
      _
    $region45: #{tpu_custom_call.1} parent=1 // pred_fallthru
      _
    // Predicated region
    $region46: #{tpu_custom_call.1} parent=1 // pred_check
      _
    $region47: #{tpu_custom_call.1} parent=1 // pred_check_branch
      %43 = sbr.rel (0) target = $region49
    $region48: #{tpu_custom_call.1} parent=1 // pred_region
      _
    $region49: #{tpu_custom_call.1} parent=1 // pred_fallthru
      _
    %v44 = vld [vmem:[%s1] sm:$0xff]
    %v45 = vld [vmem:[%s1 + $0x8] sm:$0xff]
    %v46 = vld [vmem:[%s2] sm:$0xff]
    %v47 = vld [vmem:[%s2 + $0x8] sm:$0xff]
    %v48 = vmul.f32 %v44, %v46
    %v49 = vmul.f32 %v45, %v47
    %v50 = vld [vmem:[%s0] sm:$0xff]
    %v51 = vld [vmem:[%s0 + $0x8] sm:$0xff]
    %v52 = vld [vmem:[%s0 + $0x10] sm:$0xff]
    %v53 = vld [vmem:[%s0 + $0x18] sm:$0xff]
    %v54 = vld [vmem:[%s3] sm:$0xff]
    %v55 = vld [vmem:[%s3 + $0x8] sm:$0xff]
    %v56 = vld [vmem:[%s3 + $0x10] sm:$0xff]
    %v57 = vld [vmem:[%s3 + $0x18] sm:$0xff]
    %v58 = vld [vmem:[%s4] sm:$0xff]
    %v59 = vld [vmem:[%s4 + $0x8] sm:$0xff]
    %v60 = vld [vmem:[%s4 + $0x10] sm:$0xff]
    %v61 = vld [vmem:[%s4 + $0x18] sm:$0xff]
    %63 = vset.pattern.permute.xlu0 0
    %64 = vperm.xlu0 %63, %v58
    %v65 = vpop.permute.xlu0 %64
    %68 = vset.pattern.permute.xlu0 0
    %69 = vperm.xlu0 %68, %v59
    %v70 = vpop.permute.xlu0 %69
    %73 = vset.pattern.permute.xlu0 0
    %74 = vperm.xlu0 %73, %v60
    %v75 = vpop.permute.xlu0 %74
    %78 = vset.pattern.permute.xlu0 0
    %79 = vperm.xlu0 %78, %v61
    %v80 = vpop.permute.xlu0 %79
    %vm82 = vcmask 130048
    %v84 = vsel %vm82, %v54, 0
    %v87 = vsel %vm82, %v55, 0
    %v90 = vsel %vm82, %v56, 0
    %v93 = vsel %vm82, %v57, 0
    %95 = vmatpush.msra.mxu0 0.0
    %96 = vmatpush.msra.mxu0 0.0
    %97 = vmatpush.msra.mxu0 0.0
    %98 = vmatpush.msra.mxu0 0.0
    %99 = vmatpush.msra.mxu0 0.0
    %100 = vmatpush.msra.mxu0 0.0
    %101 = vmatpush.msra.mxu0 0.0
    %102 = vmatpush.msra.mxu0 0.0
    %103 = vmatpush.msra.mxu0 0.0
    %104 = vmatpush.msra.mxu0 0.0
    %105 = vmatpush.msra.mxu0 0.0
    %106 = vmatpush.msra.mxu0 0.0
    %107 = vmatpush.msra.mxu0 0.0
    %108 = vmatpush.msra.mxu0 0.0
    %109 = vmatpush.msra.mxu0 %v52
    %110 = vmatpush.msra.mxu0 %v50
    %111 = vmatmul.f32.gmra.mxu0 %v84
    %v112 = vpop.f32.mrf.mxu0
    %v113 = vadd.f32 %v65, %v112
    %114 = vmatmul.f32.gmra.mxu0 %v87
    %v115 = vpop.f32.mrf.mxu0
    %v116 = vadd.f32 %v70, %v115
    %117 = vmatmul.f32.gmra.mxu0 %v90
    %v118 = vpop.f32.mrf.mxu0
    %v119 = vadd.f32 %v75, %v118
    %120 = vmatmul.f32.gmra.mxu0 %v93
    %v121 = vpop.f32.mrf.mxu0
    %v122 = vadd.f32 %v80, %v121
    %123 = vdwg.mxu0
    %124 = vmatpush.msra.mxu0 0.0
    %125 = vmatpush.msra.mxu0 0.0
    %126 = vmatpush.msra.mxu0 0.0
    %127 = vmatpush.msra.mxu0 0.0
    %128 = vmatpush.msra.mxu0 0.0
    %129 = vmatpush.msra.mxu0 0.0
    %130 = vmatpush.msra.mxu0 0.0
    %131 = vmatpush.msra.mxu0 0.0
    %132 = vmatpush.msra.mxu0 0.0
    %133 = vmatpush.msra.mxu0 0.0
    %134 = vmatpush.msra.mxu0 0.0
    %135 = vmatpush.msra.mxu0 0.0
    %136 = vmatpush.msra.mxu0 0.0
    %137 = vmatpush.msra.mxu0 0.0
    %138 = vmatpush.msra.mxu0 %v53
    %139 = vmatpush.msra.mxu0 %v51
    %140 = vmatmul.f32.gmra.mxu0 %v84
    %v141 = vpop.f32.mrf.mxu0
    %v142 = vadd.f32 %v65, %v141
    %143 = vmatmul.f32.gmra.mxu0 %v87
    %v144 = vpop.f32.mrf.mxu0
    %v145 = vadd.f32 %v70, %v144
    %146 = vmatmul.f32.gmra.mxu0 %v90
    %v147 = vpop.f32.mrf.mxu0
    %v148 = vadd.f32 %v75, %v147
    %149 = vmatmul.f32.gmra.mxu0 %v93
    %v150 = vpop.f32.mrf.mxu0
    %v151 = vadd.f32 %v80, %v150
    %152 = vdwg.mxu0
    %v153 = vmax.f32 %v113, 0.0
    %v154 = vmax.f32 %v142, 0.0
    %v155 = vmax.f32 %v116, 0.0
    %v156 = vmax.f32 %v145, 0.0
    %v157 = vmax.f32 %v119, 0.0
    %v158 = vmax.f32 %v148, 0.0
    %v159 = vmax.f32 %v122, 0.0
    %v160 = vmax.f32 %v151, 0.0
    %v161 = vld [vmem:[%s5] sm:$0xff]
    %v162 = vld [vmem:[%s5 + $0x8] sm:$0xff]
    %v163 = vld [vmem:[%s6] sm:$0xff]
    %v164 = vld [vmem:[%s6 + $0x8] sm:$0xff]
    %166 = vset.pattern.permute.xlu0 0
    %167 = vperm.xlu0 %166, %v163
    %v168 = vpop.permute.xlu0 %167
    %171 = vset.pattern.permute.xlu0 0
    %172 = vperm.xlu0 %171, %v164
    %v173 = vpop.permute.xlu0 %172
    %vm175 = vcmask 261120
    %v177 = vsel %vm175, %v161, 0
    %v180 = vsel %vm175, %v162, 0
    %182 = vmatpush.msra.mxu0 0.0
    %183 = vmatpush.msra.mxu0 0.0
    %184 = vmatpush.msra.mxu0 0.0
    %185 = vmatpush.msra.mxu0 0.0
    %186 = vmatpush.msra.mxu0 0.0
    %187 = vmatpush.msra.mxu0 0.0
    %188 = vmatpush.msra.mxu0 0.0
    %189 = vmatpush.msra.mxu0 0.0
    %190 = vmatpush.msra.mxu0 0.0
    %191 = vmatpush.msra.mxu0 0.0
    %192 = vmatpush.msra.mxu0 0.0
    %193 = vmatpush.msra.mxu0 0.0
    %194 = vmatpush.msra.mxu0 %v159
    %195 = vmatpush.msra.mxu0 %v157
    %196 = vmatpush.msra.mxu0 %v155
    %197 = vmatpush.msra.mxu0 %v153
    %198 = vmatmul.f32.gmra.mxu0 %v177
    %v199 = vpop.f32.mrf.mxu0
    %v200 = vadd.f32 %v168, %v199
    %201 = vmatmul.f32.gmra.mxu0 %v180
    %v202 = vpop.f32.mrf.mxu0
    %v203 = vadd.f32 %v173, %v202
    %204 = vdwg.mxu0
    %205 = vmatpush.msra.mxu0 0.0
    %206 = vmatpush.msra.mxu0 0.0
    %207 = vmatpush.msra.mxu0 0.0
    %208 = vmatpush.msra.mxu0 0.0
    %209 = vmatpush.msra.mxu0 0.0
    %210 = vmatpush.msra.mxu0 0.0
    %211 = vmatpush.msra.mxu0 0.0
    %212 = vmatpush.msra.mxu0 0.0
    %213 = vmatpush.msra.mxu0 0.0
    %214 = vmatpush.msra.mxu0 0.0
    %215 = vmatpush.msra.mxu0 0.0
    %216 = vmatpush.msra.mxu0 0.0
    %217 = vmatpush.msra.mxu0 %v160
    %218 = vmatpush.msra.mxu0 %v158
    %219 = vmatpush.msra.mxu0 %v156
    %220 = vmatpush.msra.mxu0 %v154
    %221 = vmatmul.f32.gmra.mxu0 %v177
    %v222 = vpop.f32.mrf.mxu0
    %v223 = vadd.f32 %v168, %v222
    %224 = vmatmul.f32.gmra.mxu0 %v180
    %v225 = vpop.f32.mrf.mxu0
    %v226 = vadd.f32 %v173, %v225
    %227 = vdwg.mxu0
    %v228 = vmax.f32 %v200, 0.0
    %v229 = vmax.f32 %v223, 0.0
    %v230 = vmax.f32 %v203, 0.0
    %v231 = vmax.f32 %v226, 0.0
    %v232 = vld [vmem:[%s7] sm:$0xff]
    %v233 = vld [vmem:[%s8] sm:$0xff]
    %235 = vset.pattern.permute.xlu0 0
    %236 = vperm.xlu0 %235, %v233
    %v237 = vpop.permute.xlu0 %236
    %v240 = vsel %vm82, %v232, 0
    %242 = vmatpush.msra.mxu0 0.0
    %243 = vmatpush.msra.mxu0 0.0
    %244 = vmatpush.msra.mxu0 0.0
    %245 = vmatpush.msra.mxu0 0.0
    %246 = vmatpush.msra.mxu0 0.0
    %247 = vmatpush.msra.mxu0 0.0
    %248 = vmatpush.msra.mxu0 0.0
    %249 = vmatpush.msra.mxu0 0.0
    %250 = vmatpush.msra.mxu0 0.0
    %251 = vmatpush.msra.mxu0 0.0
    %252 = vmatpush.msra.mxu0 0.0
    %253 = vmatpush.msra.mxu0 0.0
    %254 = vmatpush.msra.mxu0 0.0
    %255 = vmatpush.msra.mxu0 0.0
    %256 = vmatpush.msra.mxu0 %v230
    %257 = vmatpush.msra.mxu0 %v228
    %258 = vmatmul.f32.gmra.mxu0 %v240
    %v259 = vpop.f32.mrf.mxu0
    %v260 = vadd.f32 %v237, %v259
    %261 = vdwg.mxu0
    %262 = vmatpush.msra.mxu0 0.0
    %263 = vmatpush.msra.mxu0 0.0
    %264 = vmatpush.msra.mxu0 0.0
    %265 = vmatpush.msra.mxu0 0.0
    %266 = vmatpush.msra.mxu0 0.0
    %267 = vmatpush.msra.mxu0 0.0
    %268 = vmatpush.msra.mxu0 0.0
    %269 = vmatpush.msra.mxu0 0.0
    %270 = vmatpush.msra.mxu0 0.0
    %271 = vmatpush.msra.mxu0 0.0
    %272 = vmatpush.msra.mxu0 0.0
    %273 = vmatpush.msra.mxu0 0.0
    %274 = vmatpush.msra.mxu0 0.0
    %275 = vmatpush.msra.mxu0 0.0
    %276 = vmatpush.msra.mxu0 %v231
    %277 = vmatpush.msra.mxu0 %v229
    %278 = vmatmul.f32.gmra.mxu0 %v240
    %v279 = vpop.f32.mrf.mxu0
    %v280 = vadd.f32 %v237, %v279
    %281 = vdwg.mxu0
    %v282 = vmax.f32 %v260, 0.0
    %v283 = vmax.f32 %v280, 0.0
    %v284 = vld [vmem:[%s9] sm:$0xff]
    %v285 = vld [vmem:[%s10] sm:$0xff]
    %v286 = vld [vmem:[#allocation2] sm:$0x1]
    %288 = vset.pattern.permute.xlu0 0
    %289 = vperm.xlu0 %288, %v284
    %v290 = vpop.permute.xlu0 %289
    %v292 = vmul.f32 %v282, %v290
    %v293 = vmul.f32 %v283, %v290
    %v294 = vrot.slane %v292, 4
    %v295 = vadd.f32 %v292, %v294
    %v296 = vrot.slane %v295, 2
    %v297 = vadd.f32 %v295, %v296
    %v298 = vrot.slane %v297, 1
    %v299 = vadd.f32 %v297, %v298
    %v300 = vrot.slane %v293, 4
    %v301 = vadd.f32 %v293, %v300
    %v302 = vrot.slane %v301, 2
    %v303 = vadd.f32 %v301, %v302
    %v304 = vrot.slane %v303, 1
    %v305 = vadd.f32 %v303, %v304
    %307 = vset.pattern.permute.xlu0 0
    %308 = vperm.xlu0 %307, %v285
    %v309 = vpop.permute.xlu0 %308
    %v311 = vmul.f32 %v48, %v309
    %v312 = vmul.f32 %v49, %v309
    %v313 = vrot.slane %v311, 4
    %v314 = vadd.f32 %v311, %v313
    %v315 = vrot.slane %v314, 2
    %v316 = vadd.f32 %v314, %v315
    %v317 = vrot.slane %v316, 1
    %v318 = vadd.f32 %v316, %v317
    %v319 = vrot.slane %v312, 4
    %v320 = vadd.f32 %v312, %v319
    %v321 = vrot.slane %v320, 2
    %v322 = vadd.f32 %v320, %v321
    %v323 = vrot.slane %v322, 1
    %v324 = vadd.f32 %v322, %v323
    %v325 = vadd.f32 %v299, %v318
    %v326 = vadd.f32 %v305, %v324
    %328 = vset.pattern.permute.xlu0 0
    %329 = vperm.xlu0 %328, %v286
    %v330 = vpop.permute.xlu0 %329
    %v332 = vperm.slane %v330, 0
    %v333 = vadd.f32 %v325, %v332
    %v334 = vadd.f32 %v326, %v332
    %v335 = vxor.u32 %v333, 2147483648
    %v336 = vxor.u32 %v334, 2147483648
    %v337 = vmul.f32 %v335, 1.442695
    %v338 = vpow.pop %v337
    %v339 = vmul.f32 %v336, 1.442695
    %v340 = vpow.pop %v339
    %v341 = vadd.f32 %v338, 1.0
    %v342 = vadd.f32 %v340, 1.0
    %v343 = vrcp.pop %v341
    %v344 = vmul.f32 %v341, %v343
    %v345 = vsub.f32 1.0, %v344
    %v346 = vmul.f32 %v343, %v345
    %v347 = vadd.f32 %v343, %v346
    %vm348 = vweird.f32 %v341
    %vm349 = vweird.f32 %v343
    %vm350 = vmor %vm348, %vm349
    %v351 = vsel %vm350, %v343, %v347
    %v352 = vand.u32 2147483647, %v341
    %vm353 = vcmp.eq.f32.partialorder %v352, 8.507059e+37
    %v354 = vand.u32 %v341, 2147483648
    %v355 = vor.u32 1.1754944e-38, %v354
    %v356 = vsel %vm353, %v355, %v351
    %v357 = vmul.f32 1.0, %v356
    %v358 = vrcp.pop %v342
    %v359 = vmul.f32 %v342, %v358
    %v360 = vsub.f32 1.0, %v359
    %v361 = vmul.f32 %v358, %v360
    %v362 = vadd.f32 %v358, %v361
    %vm363 = vweird.f32 %v342
    %vm364 = vweird.f32 %v358
    %vm365 = vmor %vm363, %vm364
    %v366 = vsel %vm365, %v358, %v362
    %v367 = vand.u32 2147483647, %v342
    %vm368 = vcmp.eq.f32.partialorder %v367, 8.507059e+37
    %v369 = vand.u32 %v342, 2147483648
    %v370 = vor.u32 1.1754944e-38, %v369
    %v371 = vsel %vm368, %v370, %v366
    %v372 = vmul.f32 1.0, %v371
    %v375 = vrot.slane %v372, 7
    %vm376 = vcmask 1040384
    %v377 = vsel %vm376, %v357, %v375
    %v379 = vlaneseq
    %vm380 = vcmp.ge.s32.totalorder %v379, 0
    %vm381 = vcmp.lt.s32.totalorder %v379, 256
    %vm382 = vmand %vm380, %vm381
    %383 = vst.msk [vmem:[#allocation3] sm:$0x3] %vm382, %v377
    // Predicated region
    $region50: #{tpu_custom_call.1} parent=1 // pred_check
      _
    $region51: #{tpu_custom_call.1} parent=1 // pred_check_branch
      %385 = sbr.rel (0) target = $region53
    $region52: #{tpu_custom_call.1} parent=1 // pred_region
      %387 = vsyncadd [#allocation4], 0
      %s389 = sshll.u32 [#allocation3], 4
      %s390 = int_to_ptr.vmem [resolvable:$true] %s389
      %s391 = sshll.u32 %s12, 4
      %s392 = int_to_ptr.hbm [resolvable:$true] %s391
      %394 = dma.vmem_to_hbm [thread:$0]  %s390, 32, %s392, [#allocation4]
    $region53: #{tpu_custom_call.1} parent=1 // pred_fallthru
      _
    // Predicated region
    $region54: #{tpu_custom_call.1} parent=1 // pred_check
      _
    $region55: #{tpu_custom_call.1} parent=1 // pred_check_branch
      %396 = sbr.rel (0) target = $region57
    $region56: #{tpu_custom_call.1} parent=1 // pred_region
      %398 = dma.done [#allocation4], 32
    $region57: #{tpu_custom_call.1} parent=1 // pred_fallthru
      _
    %399 = vsyncpa [#allocation4], 1

</llo_original>
